<compile_context>
chip_gen: v7x
topology: tpu7x:2x2x1
jax: 0.10.0
libtpu: 0.0.40
codegen_flags: <defaults>
</compile_context>

<pallas_src>
import functools

import jax
import jax.numpy as jnp
from jax.experimental import pallas as pl
from jax.experimental.pallas import tpu as pltpu

# Logical alignment constants from the SM100 module (parameter shapes).
MMA_ALIGN_N = 256   # out_features alignment of the weight parameter
MMA_ALIGN_K = 64    # in_features alignment of the weight parameter

# TPU-side kernel alignment (lane width).
TPU_LANE = 128


def _round_up(x, m):
    return (x + m - 1) // m * m


# ---------------------------------------------------------------------------
# Kernel
# ---------------------------------------------------------------------------
def _gemm_kernel(*refs, alpha, has_bias, num_k):
    """Grid (i, j[, k]).  The f32 output block is the accumulator; the
    epilogue applies alpha / bias once on the last K step."""
    if has_bias:
        a_ref, w_ref, b_ref, o_ref = refs
    else:
        a_ref, w_ref, o_ref = refs
        b_ref = None

    # A tile (tm, tk) bf16 x W^T tile (tk, tn) bf16 -> (tm, tn) f32 on the MXU.
    partial = jnp.dot(a_ref[...], w_ref[...],
                      preferred_element_type=jnp.float32)

    if num_k == 1:
        # Single K step (the common path): no init / read-modify-write / copy.
        res = partial
        if alpha != 1.0:
            res = res * alpha
        if b_ref is not None:
            res = res + b_ref[...]          # (1, tn) broadcasts over rows
        o_ref[...] = res
    else:
        k = pl.program_id(2)

        @pl.when(k == 0)
        def _():                            # first step: plain write (no zero-fill)
            o_ref[...] = partial

        @pl.when(k != 0)
        def _():                            # accumulate directly into o_ref (f32)
            o_ref[...] = o_ref[...] + partial

        @pl.when(k == num_k - 1)
        def _():
            res = o_ref[...]
            if alpha != 1.0:
                res = res * alpha
            if b_ref is not None:
                res = res + b_ref[...]
            o_ref[...] = res


def sm100_gemm_pallas(A, Wt, c_row=None, alpha=1.0, *, tm, tn, tk):
    """D = alpha * A @ Wt + c_row,  A (M,K) bf16, Wt (K,N) bf16, D (M,N) f32.

    `c_row` is an optional (1, N) f32 row (beta already folded in) added to
    every output row."""
    M, K = A.shape
    K_w, N = Wt.shape
    assert K == K_w, (K, K_w)
    assert M % tm == 0 and N % tn == 0 and K % tk == 0, (M, N, K, tm, tn, tk)

    num_k = K // tk
    has_bias = c_row is not None
    single_k = (num_k == 1)

    if single_k:
        grid = (M // tm, N // tn)
        a_spec = pl.BlockSpec((tm, tk), lambda i, j: (i, 0))
        w_spec = pl.BlockSpec((tk, tn), lambda i, j: (0, j))
        b_spec = pl.BlockSpec((1, tn), lambda i, j: (0, j))
        o_spec = pl.BlockSpec((tm, tn), lambda i, j: (i, j))
        dim_sem = ("parallel", "parallel")
    else:
        grid = (M // tm, N // tn, num_k)
        a_spec = pl.BlockSpec((tm, tk), lambda i, j, k: (i, k))
        w_spec = pl.BlockSpec((tk, tn), lambda i, j, k: (k, j))
        b_spec = pl.BlockSpec((1, tn), lambda i, j, k: (0, j))
        o_spec = pl.BlockSpec((tm, tn), lambda i, j, k: (i, j))
        dim_sem = ("parallel", "parallel", "arbitrary")

    in_specs = [a_spec, w_spec]
    args = [A, Wt]
    if has_bias:
        in_specs.append(b_spec)
        args.append(c_row)

    kernel = functools.partial(_gemm_kernel, alpha=float(alpha),
                               has_bias=has_bias, num_k=num_k)

    # Advisory cost so XLA overlaps the surrounding cast/pad/slice.
    flops = 2 * M * N * K
    bytes_accessed = (M * K * A.dtype.itemsize + K * N * Wt.dtype.itemsize
                      + M * N * 4 + (N * 4 if has_bias else 0))

    # Double-buffered blocks + margin; capped so it stays safe on v7x's
    # 64 MiB physical VMEM while still raising v5e's 16 MiB scoped default.
    vmem_est = 2 * (tm * tk * 2 + tk * tn * 2 + tm * tn * 4) + 2 * tn * 4 + (4 << 20)
    vmem_limit = int(min(max(vmem_est, 32 << 20), 48 << 20))

    return pl.pallas_call(
        kernel,
        out_shape=jax.ShapeDtypeStruct((M, N), jnp.float32),
        grid_spec=pltpu.PrefetchScalarGridSpec(
            num_scalar_prefetch=0,
            grid=grid,
            in_specs=in_specs,
            out_specs=o_spec,
        ),
        compiler_params=pltpu.CompilerParams(
            dimension_semantics=dim_sem,
            vmem_limit_bytes=vmem_limit),
        cost_estimate=pl.CostEstimate(flops=flops, transcendentals=0,
                                      bytes_accessed=bytes_accessed),
    )(*args)


# ---------------------------------------------------------------------------
# Tile selection + jitted forward
# ---------------------------------------------------------------------------
def _pick_tn(n_kernel, m_tiles):
    cands = [t for t in (512, 256, 128) if t <= n_kernel and n_kernel % t == 0]
    if not cands:
        return n_kernel                    # n_kernel is always a 128 multiple
    tn = cands[0]
    # If there is only one M tile, try to expose >=2 parallel j blocks so both
    # TensorCores are occupied on v7x (no-op on v5e/v6e).
    if m_tiles == 1 and n_kernel // tn < 2:
        for t in cands:
            if n_kernel // t >= 2:
                tn = t
                break
    return tn


def _linear_forward(x, weight_t, c_row, *, orig_in, kernel_K, tk, orig_out):
    """x (batch, orig_in) -> (batch, orig_out) f32.  Jitted per batch shape."""
    batch = x.shape[0]
    assert x.shape[1] == orig_in, (x.shape, orig_in)
    n_kernel = weight_t.shape[1]

    x = x.astype(jnp.bfloat16)
    # K columns are padded only when the kernel K extent exceeds the input
    # width (only happens for in_features > 4096); padded weight rows are 0.
    if kernel_K != orig_in:
        x = jnp.pad(x, ((0, 0), (0, kernel_K - orig_in)))

    # M tiling: small batches run un-padded as one full-dim tile (no HBM pad
    # pass); large batches pad to a 256 multiple so tm matches the 256-wide
    # MXU pass on v6e/v7x.
    if batch <= 512:
        m_pad, tm = batch, batch
    else:
        m_pad = _round_up(batch, 256)
        tm = 512 if m_pad % 512 == 0 else 256
        if m_pad != batch:
            x = jnp.pad(x, ((0, m_pad - batch), (0, 0)))

    tn = _pick_tn(n_kernel, m_pad // tm)

    out = sm100_gemm_pallas(x, weight_t, c_row=c_row, alpha=1.0,
                            tm=tm, tn=tn, tk=tk)
    return out[:batch, :orig_out]


# ---------------------------------------------------------------------------
# Module wrapper
# ---------------------------------------------------------------------------
class SM100LinearPallas:
    """JAX/Pallas port of SM100Linear (forward only)."""

    def __init__(self, in_features, out_features, bias=True, key=None):
        self.orig_in_features = in_features
        self.orig_out_features = out_features
        # Logical CUDA parameter alignment (kept for spec compatibility).
        aligned_in = _round_up(in_features, MMA_ALIGN_K)
        aligned_out = _round_up(out_features, MMA_ALIGN_N)
        self.in_features = aligned_in
        self.out_features = aligned_out

        # TPU kernel extents: N padded only to 128 lanes; K un-padded when a
        # single full-K tile fits, otherwise padded to a 256 multiple with the
        # largest dividing tile (avoid tk=512-ish overhead-dominated loops).
        self.n_kernel = _round_up(out_features, TPU_LANE)
        if in_features <= 4096:
            self.kernel_K = in_features
            self.tk = in_features
        else:
            self.kernel_K = _round_up(in_features, 256)
            self.tk = next(t for t in (4096, 2048, 1024, 512, 256)
                           if self.kernel_K % t == 0)

        if key is None:
            key = jax.random.PRNGKey(0)
        # Matches torch.randn(aligned_out, aligned_in, dtype=fp16) * 0.1 values.
        w_f16 = (jax.random.normal(key, (aligned_out, aligned_in),
                                   dtype=jnp.float32) * 0.1).astype(jnp.float16)
        # Keep only the slice that can contribute to the sliced output:
        #  - output columns beyond orig_out are discarded by the forward slice,
        #  - weight columns beyond orig_in multiply zero-padded x columns.
        w_t = jnp.transpose(
            w_f16[:self.n_kernel, :in_features]).astype(jnp.bfloat16)
        if self.kernel_K != in_features:
            w_t = jnp.pad(w_t, ((0, self.kernel_K - in_features), (0, 0)))
        self.weight_t = w_t                      # (kernel_K, n_kernel) bf16, K-major
        # Per review: the fp16 (aligned_out, aligned_in) copy is not retained.

        if bias:
            # beta = 1.0 is folded into this row vector (bias param is zeros).
            self.bias = jnp.zeros((aligned_out,), dtype=jnp.float32)
            self.c_row = jnp.reshape(self.bias[:self.n_kernel],
                                     (1, self.n_kernel)).astype(jnp.float32)
        else:
            self.bias = None
            self.c_row = None

        self._fwd = jax.jit(functools.partial(
            _linear_forward,
            orig_in=in_features, kernel_K=self.kernel_K, tk=self.tk,
            orig_out=out_features))

    def __call__(self, x):
        # x: (batch, orig_in_features), any float dtype (fp16 in the CUDA spec).
        return self._fwd(x, self.weight_t, self.c_row)


# ---------------------------------------------------------------------------
# Smoke test
# ---------------------------------------------------------------------------
if __name__ == "__main__":
    key = jax.random.PRNGKey(0)
    k_w, k_x, k_a, k_b = jax.random.split(key, 4)

    # --- layer path: batch=8, in=32 (param-aligned 64), out=40 (param-aligned 256)
    batch, in_features, out_features = 8, 32, 40
    layer = SM100LinearPallas(in_features, out_features, bias=True, key=k_w)

    x = (jax.random.normal(k_x, (batch, in_features), dtype=jnp.float32)
         .astype(jnp.bfloat16))
    out = jax.block_until_ready(layer(x))

    # Pure-JAX reference using the exact bf16 operands the kernel consumed.
    w_ref = layer.weight_t[:in_features, :out_features].astype(jnp.float32)
    ref = x.astype(jnp.float32) @ w_ref + layer.bias[:out_features]

    assert out.shape == (batch, out_features), out.shape
    assert out.dtype == jnp.float32, out.dtype
    assert jnp.allclose(out, ref, atol=1e-2, rtol=1e-2)

    # --- exercise the multi-K-step (accumulating) kernel path at tiny shapes
    A2 = (jax.random.normal(k_a, (16, 256), dtype=jnp.float32) * 0.1
          ).astype(jnp.bfloat16)
    W2 = (jax.random.normal(k_b, (256, 128), dtype=jnp.float32) * 0.1
          ).astype(jnp.bfloat16)
    out2 = jax.block_until_ready(
        sm100_gemm_pallas(A2, W2, c_row=None, tm=16, tn=128, tk=128))
    ref2 = A2.astype(jnp.float32) @ W2.astype(jnp.float32)
    assert jnp.allclose(out2, ref2, atol=1e-2, rtol=1e-2)

    print("KERNEL_OK")
</pallas_src>

<mosaic_0001>
module attributes {stable_mosaic.version = 11 : i64} {
  func.func @_gemm_kernel(%arg0: i32, %arg1: i32, %arg2: memref<8x32xbf16, #tpu.memory_space<vmem>>, %arg3: memref<32x128xbf16, #tpu.memory_space<vmem>>, %arg4: memref<1x128xf32, #tpu.memory_space<vmem>>, %arg5: memref<8x128xf32, #tpu.memory_space<vmem>>) attributes {dimension_semantics = [#tpu.dimension_semantics<parallel>, #tpu.dimension_semantics<parallel>], iteration_bounds = array<i64: 1, 1>, scalar_prefetch = 0 : i64, scratch_operands = 0 : i64, tpu.core_type = #tpu.core_type<tc>, window_params = [{transform_indices = @transform_0, window_bounds = array<i64: 8, 32>}, {transform_indices = @transform_1, window_bounds = array<i64: 32, 128>}, {transform_indices = @transform_2, window_bounds = array<i64: 1, 128>}, {transform_indices = @transform_3, window_bounds = array<i64: 8, 128>}]} {
    %c0 = arith.constant 0 : index
    %c0_0 = arith.constant 0 : index
    %0 = vector.load %arg2[%c0, %c0_0] : memref<8x32xbf16, #tpu.memory_space<vmem>>, vector<8x32xbf16>
    %c0_1 = arith.constant 0 : index
    %c0_2 = arith.constant 0 : index
    %1 = vector.load %arg3[%c0_1, %c0_2] : memref<32x128xbf16, #tpu.memory_space<vmem>>, vector<32x128xbf16>
    %cst = arith.constant dense<0.000000e+00> : vector<8x128xf32>
    %2 = tpu.matmul %0, %1, %cst {dimension_numbers = #tpu.dot_dimension_numbers<[1], [0], [0], [1], [0, 0, 1, 1], [], []>} : vector<8x32xbf16>, vector<32x128xbf16>, vector<8x128xf32> -> vector<8x128xf32>
    %c0_3 = arith.constant 0 : index
    %c0_4 = arith.constant 0 : index
    %3 = vector.load %arg4[%c0_3, %c0_4] : memref<1x128xf32, #tpu.memory_space<vmem>>, vector<1x128xf32>
    %4 = vector.broadcast %3 : vector<1x128xf32> to vector<8x128xf32>
    %5 = arith.addf %2, %4 : vector<8x128xf32>
    %c0_5 = arith.constant 0 : index
    %c0_6 = arith.constant 0 : index
    %6 = vector.load %arg5[%c0_5, %c0_6] : memref<8x128xf32, #tpu.memory_space<vmem>>, vector<8x128xf32>
    tpu.vector_store %arg5[%c0_5, %c0_6], %5 {strides = array<i32>} : memref<8x128xf32, #tpu.memory_space<vmem>>, vector<8x128xf32>,
    return
  }
  func.func @transform_0(%arg0: i32, %arg1: i32) -> (i32, i32) {
    %c0_i32 = arith.constant 0 : i32
    %c0_i32_0 = arith.constant 0 : i32
    return %arg0, %c0_i32 : i32, i32
  }
  func.func @transform_1(%arg0: i32, %arg1: i32) -> (i32, i32) {
    %c0_i32 = arith.constant 0 : i32
    %c0_i32_0 = arith.constant 0 : i32
    return %c0_i32, %arg1 : i32, i32
  }
  func.func @transform_2(%arg0: i32, %arg1: i32) -> (i32, i32) {
    %c0_i32 = arith.constant 0 : i32
    %c0_i32_0 = arith.constant 0 : i32
    return %c0_i32, %arg1 : i32, i32
  }
  func.func @transform_3(%arg0: i32, %arg1: i32) -> (i32, i32) {
    %c0_i32 = arith.constant 0 : i32
    return %arg0, %arg1 : i32, i32
  }
}

</mosaic_0001>

<llo_original>
// kernel: _linear_forward.1
$region0: #{_linear_forward.1}
  #allocation0 [shape = 'u32[]', space=smem, size = 0x4, offset = 0x4, fixed_abs, tag = 'smem constant byte address 0x4 - core index']
  #allocation1 [shape = 'u32[144,128]{1,0:T(1,128)}', space=vmem, size = 0x12000, scoped, tag = 'internal scratch']
  %s0 = inlined_call_operand.hbm [shape: bf16[8,32], index: 0, kind: input, shape index: {}]
  %s1 = inlined_call_operand.hbm [shape: bf16[32,128], index: 1, kind: input, shape index: {}]
  %s2 = inlined_call_operand.vmem [shape: f32[1,128], index: 2, kind: input, shape index: {}]
  %s3 = inlined_call_operand.hbm [shape: f32[8,128], index: 3, kind: output, shape index: {}]
  %s4 = sld [smem:[#allocation0]]
  $region30: #{_linear_forward.1} parent=0
    _
  %s6 = ssub.s32 1, %s4
  %s7 = scalar_select 0, %s6, %s4
  $region1: #{_linear_forward.1} parent=0
    #allocation2 [shape = 'u8[2048]{0}', space=vmem, size = 0x800, scoped, tag = 'input window, operand 0, single buffered']
    #allocation3 [shape = 's32[1]{0}', space=sflag, size = 0x4, scoped, tag = 'scoped memory for _linear_forward.1']
    #allocation4 [shape = 's32[1]{0}', space=sflag, size = 0x4, scoped, tag = 'scoped memory for _linear_forward.1']
    #allocation5 [shape = 'u8[8192]{0}', space=vmem, size = 0x2000, scoped, tag = 'input window, operand 1, single buffered']
    #allocation6 [shape = 's32[1]{0}', space=sflag, size = 0x4, scoped, tag = 'scoped memory for _linear_forward.1']
    #allocation7 [shape = 'u8[4096]{0}', space=vmem, size = 0x1000, scoped, tag = 'output window, operand 0, single buffered']
    %8 = vsyncpa [#allocation3], 0
    %9 = vsyncpa [#allocation6], 0
    %10 = vsyncpa [#allocation4], 0
    // Predicated region
    $region2: #{_linear_forward.1} parent=1 // pred_check
      _
    $region3: #{_linear_forward.1} parent=1 // pred_check_branch
      %12 = sbr.rel (0) target = $region5
    $region4: #{_linear_forward.1} parent=1 // pred_region
      %s14 = ssub.s32 64, 64
      %15 = vsyncadd [#allocation3], %s14
      %s17 = sshll.u32 [#allocation2], 4
      %s18 = int_to_ptr.vmem [resolvable:$true] %s17
      %20 = dma.hbm_to_vmem [thread:$0]  %s0, 64, %s18, [#allocation3]
    $region5: #{_linear_forward.1} parent=1 // pred_fallthru
      _
    // Predicated region
    $region6: #{_linear_forward.1} parent=1 // pred_check
      _
    $region7: #{_linear_forward.1} parent=1 // pred_check_branch
      %22 = sbr.rel (0) target = $region9
    $region8: #{_linear_forward.1} parent=1 // pred_region
      %s24 = ssub.s32 256, 256
      %25 = vsyncadd [#allocation6], %s24
      %s26 = sshll.u32 [#allocation5], 4
      %s27 = int_to_ptr.vmem [resolvable:$true] %s26
      %32 = dma.hbm_to_vmem [thread:$0]  %s1, 256, %s27, [#allocation6], 64, 64, 4
    $region9: #{_linear_forward.1} parent=1 // pred_fallthru
      _
    // Predicated region
    $region10: #{_linear_forward.1} parent=1 // pred_check
      _
    $region11: #{_linear_forward.1} parent=1 // pred_check_branch
      %34 = sbr.rel (0) target = $region13
    $region12: #{_linear_forward.1} parent=1 // pred_region
      _
    $region13: #{_linear_forward.1} parent=1 // pred_fallthru
      _
    // Predicated region
    $region14: #{_linear_forward.1} parent=1 // pred_check
      _
    $region15: #{_linear_forward.1} parent=1 // pred_check_branch
      %36 = sbr.rel (0) target = $region17
    $region16: #{_linear_forward.1} parent=1 // pred_region
      %37 = dma.done [#allocation3], 64
    $region17: #{_linear_forward.1} parent=1 // pred_fallthru
      _
    // Predicated region
    $region18: #{_linear_forward.1} parent=1 // pred_check
      _
    $region19: #{_linear_forward.1} parent=1 // pred_check_branch
      %39 = sbr.rel (0) target = $region21
    $region20: #{_linear_forward.1} parent=1 // pred_region
      %40 = dma.done [#allocation6], 256
    $region21: #{_linear_forward.1} parent=1 // pred_fallthru
      _
    %v42 = vld [vmem:[#allocation2] sm:$0xf]
    %v43 = vld [vmem:[#allocation5] sm:$0xf]
    %v44 = vld [vmem:[#allocation5 + $0x4] sm:$0xf]
    %v45 = vld [vmem:[#allocation5 + $0x8] sm:$0xf]
    %v46 = vld [vmem:[#allocation5 + $0xc] sm:$0xf]
    %v47 = vld [vmem:[%s2] sm:$0x1]
    %v49 = vlaneseq
    %v50 = vshrl.u32 %v49, 7
    %v51 = vsub.s32 0, %v50
    %v52 = vrot.slane %v47, %v51
    %v58 = vunpack.c.l.b16 %v43
    %v59 = vunpack.c.l.b16 %v44
    %v60 = vunpack.c.l.b16 %v45
    %v61 = vunpack.c.l.b16 %v46
    %v62 = vpack.c.b16 %v59, %v58
    %v63 = vpack.c.b16 %v61, %v60
    %vm66 = vcmask 261120
    %v68 = vsel %vm66, %v42, 0
    %70 = vmatprep.subr.bf16.mxu0 0
    %71 = vmatpush1.bf16.msra.mxu0 %v62
    %72 = vmatprep.subr.bf16.mxu0 0
    %73 = vmatpush1.bf16.msra.mxu0 %v63
    %74 = vmatprep.subr.bf16.mxu0 0
    %75 = vmatpush1.bf16.msra.mxu0 0
    %76 = vmatprep.subr.bf16.mxu0 0
    %77 = vmatpush1.bf16.msra.mxu0 0
    %78 = vmatprep.subr.bf16.mxu0 0
    %79 = vmatpush1.bf16.msra.mxu0 0
    %80 = vmatprep.subr.bf16.mxu0 0
    %81 = vmatpush1.bf16.msra.mxu0 0
    %82 = vmatprep.subr.bf16.mxu0 0
    %83 = vmatpush1.bf16.msra.mxu0 0
    %84 = vmatprep.subr.bf16.mxu0 0
    %85 = vmatpush1.bf16.msra.mxu0 0
    %86 = vmatprep.subr.bf16.mxu0 0
    %87 = vmatpush1.bf16.msra.mxu0 0
    %88 = vmatprep.subr.bf16.mxu0 0
    %89 = vmatpush1.bf16.msra.mxu0 0
    %90 = vmatprep.subr.bf16.mxu0 0
    %91 = vmatpush1.bf16.msra.mxu0 0
    %92 = vmatprep.subr.bf16.mxu0 0
    %93 = vmatpush1.bf16.msra.mxu0 0
    %94 = vmatprep.subr.bf16.mxu0 0
    %95 = vmatpush1.bf16.msra.mxu0 0
    %96 = vmatprep.subr.bf16.mxu0 0
    %97 = vmatpush1.bf16.msra.mxu0 0
    %98 = vmatprep.subr.bf16.mxu0 0
    %99 = vmatpush1.bf16.msra.mxu0 0
    %100 = vmatprep.subr.bf16.mxu0 0
    %101 = vmatpush1.bf16.msra.mxu0 0
    %102 = vmatprep.mubr.bf16.mxu0 0
    %103 = vmatmul.mubr.bf16.gmra.mrb[0].mxu0 %v68
    %v104 = vpop.f32.mrb[0].mxu0
    %v105 = vadd.f32 %v52, %v104
    %v106 = vpop.f32.mrb[0].mxu0
    %v107 = vpop.f32.mrb[0].mxu0
    %v108 = vpop.f32.mrb[0].mxu0
    %109 = vdwg.mxu0
    %110 = vst [vmem:[#allocation7] sm:$0xff] %v105
    // Predicated region
    $region22: #{_linear_forward.1} parent=1 // pred_check
      _
    $region23: #{_linear_forward.1} parent=1 // pred_check_branch
      %112 = sbr.rel (0) target = $region25
    $region24: #{_linear_forward.1} parent=1 // pred_region
      %s114 = ssub.s32 128, 128
      %115 = vsyncadd [#allocation4], %s114
      %s117 = sshll.u32 [#allocation7], 4
      %s118 = int_to_ptr.vmem [resolvable:$true] %s117
      %120 = dma.vmem_to_hbm [thread:$0]  %s118, 128, %s3, [#allocation4]
    $region25: #{_linear_forward.1} parent=1 // pred_fallthru
      _
    // Predicated region
    $region26: #{_linear_forward.1} parent=1 // pred_check
      _
    $region27: #{_linear_forward.1} parent=1 // pred_check_branch
      %122 = sbr.rel (0) target = $region29
    $region28: #{_linear_forward.1} parent=1 // pred_region
      %123 = dma.done [#allocation4], 128
    $region29: #{_linear_forward.1} parent=1 // pred_fallthru
      _
    %124 = vsyncpa [#allocation3], 1
    %125 = vsyncpa [#allocation6], 1
    %126 = vsyncpa [#allocation4], 1

</llo_original>
